<compile_context>
chip_gen: v6e
topology: v6e:2x2x1
jax: 0.10.0
libtpu: 0.0.40
codegen_flags: <defaults>
</compile_context>

<pallas_src>
import functools

import jax
import jax.numpy as jnp
from jax.experimental import pallas as pl
from jax.experimental.pallas import tpu as pltpu


def _round_up(x, m):
    return ((x + m - 1) // m) * m


def _pick_tile(dim, pref, align):
    """Choose a tile size and the padded extent for one dimension.

    If the dimension fits in one preferred tile, use the full (unpadded)
    extent as a single block (always a legal block shape). Otherwise use a
    tile aligned to `align` (8 for sublane dims, 128 for lane dims) and pad
    the dimension up to a multiple of it.
    """
    if dim <= pref:
        return dim, dim
    tile = max(align, (pref // align) * align)
    return tile, _round_up(dim, tile)


def _conv1d_kernel(x_ref, w_ref, b_ref, o_ref, acc_ref):
    # x_ref: (tm, tk), w_ref: (tk, tn), b_ref: (1, tn), o_ref: (tm, tn)
    # acc_ref: (tm, tn) f32 scratch, persistent across the K grid axis.
    k = pl.program_id(2)

    @pl.when(k == 0)
    def _():
        acc_ref[...] = jnp.zeros_like(acc_ref)

    acc_ref[...] += jnp.dot(
        x_ref[...], w_ref[...], preferred_element_type=jnp.float32
    )

    @pl.when(k == pl.num_programs(2) - 1)
    def _():
        out = acc_ref[...] + b_ref[...].astype(jnp.float32)
        o_ref[...] = out.astype(o_ref.dtype)


@functools.partial(jax.jit, static_argnames=("tm", "tn", "tk", "compute_dtype"))
def conv1d_forward(x, weight, bias, *, tm=256, tn=256, tk=512,
                   compute_dtype=None):
    """y = x @ weight + bias over the last axis of x.

    x:      (..., nx)
    weight: (nx, nf)
    bias:   (nf,)
    returns (..., nf) in x's original dtype.
    """
    nx, nf = weight.shape
    lead_shape = x.shape[:-1]
    out_dtype = x.dtype

    if compute_dtype is not None:
        # e.g. bf16 operands on v6e/v7x; accumulation stays f32 in-kernel.
        x = x.astype(compute_dtype)
        weight = weight.astype(compute_dtype)

    x2d = x.reshape(-1, nx)
    M = x2d.shape[0]

    # Tile selection (clamped / aligned) and padded extents.
    tm, Mp = _pick_tile(M, tm, 8)      # second-minor dim of x / out
    tn, nfp = _pick_tile(nf, tn, 128)  # minor (lane) dim of w / b / out
    tk, nxp = _pick_tile(nx, tk, 128)  # minor dim of x, second-minor of w

    # Zero-pad remainders (zeros in K are additive-identity; padded M rows
    # and N cols are sliced off below).
    if Mp != M or nxp != nx:
        x2d = jnp.pad(x2d, ((0, Mp - M), (0, nxp - nx)))
    if nxp != nx or nfp != nf:
        weight = jnp.pad(weight, ((0, nxp - nx), (0, nfp - nf)))
    if nfp != nf:
        bias = jnp.pad(bias, (0, nfp - nf))
    bias2d = bias.reshape(1, nfp)

    grid = (Mp // tm, nfp // tn, nxp // tk)

    # Explicit VMEM budget: double-buffered input/output tiles + f32 acc.
    in_isz = jnp.dtype(x2d.dtype).itemsize
    w_isz = jnp.dtype(weight.dtype).itemsize
    out_isz = jnp.dtype(out_dtype).itemsize
    est = (2 * tm * tk * in_isz          # x tiles
           + 2 * tk * tn * w_isz         # weight tiles
           + 2 * 1 * tn * w_isz          # bias tiles (tiny)
           + 2 * tm * tn * out_isz       # output tiles
           + tm * tn * 4)                # f32 accumulator scratch
    vmem_limit = max(est + (4 << 20), 32 << 20)
    vmem_limit = min(vmem_limit, 64 << 20)   # stay under v7x physical VMEM

    out = pl.pallas_call(
        _conv1d_kernel,
        out_shape=jax.ShapeDtypeStruct((Mp, nfp), out_dtype),
        grid_spec=pltpu.PrefetchScalarGridSpec(
            num_scalar_prefetch=0,
            grid=grid,
            in_specs=[
                pl.BlockSpec((tm, tk), lambda i, j, k: (i, k)),   # x tile
                pl.BlockSpec((tk, tn), lambda i, j, k: (k, j)),   # weight tile
                pl.BlockSpec((1, tn), lambda i, j, k: (0, j)),    # bias row
            ],
            out_specs=pl.BlockSpec((tm, tn), lambda i, j, k: (i, j)),
            scratch_shapes=[pltpu.VMEM((tm, tn), jnp.float32)],
        ),
        compiler_params=pltpu.CompilerParams(
            dimension_semantics=("parallel", "parallel", "arbitrary"),
            vmem_limit_bytes=int(vmem_limit),
        ),
    )(x2d, weight, bias2d)

    out = out[:M, :nf]
    return out.reshape(*lead_shape, nf)


if __name__ == "__main__":
    # Module config: Conv1D(nf, nx) -> weight (nx, nf), bias (nf,)
    batch, seq, nx, nf = 2, 8, 32, 64

    key = jax.random.PRNGKey(0)
    k_x, k_w, k_b, k_x2 = jax.random.split(key, 4)

    # Deterministic params mirroring nn.init.normal_(w, std=0.02) + zero bias
    # (use a nonzero bias too so the bias path is actually exercised).
    weight = (0.02 * jax.random.normal(k_w, (nx, nf))).astype(jnp.float32)
    bias = (0.01 * jax.random.normal(k_b, (nf,))).astype(jnp.float32)

    x = jax.random.normal(k_x, (batch, seq, nx), dtype=jnp.float32)

    # 1) Default (large-tile) path: small problem clamps to one block.
    y = conv1d_forward(x, weight, bias)
    y = jax.block_until_ready(y)
    y_ref = (x.reshape(-1, nx) @ weight + bias).reshape(batch, seq, nf)
    assert y.shape == (batch, seq, nf)
    assert jnp.allclose(y, y_ref, atol=1e-5, rtol=1e-5)

    # 2) Exercise the tiled/padded path: non-divisible M with a small M tile.
    x2 = jax.random.normal(k_x2, (3, 5, nx), dtype=jnp.float32)  # M=15 -> pad
    y2 = conv1d_forward(x2, weight, bias, tm=8)
    y2 = jax.block_until_ready(y2)
    y2_ref = (x2.reshape(-1, nx) @ weight + bias).reshape(3, 5, nf)
    assert y2.shape == (3, 5, nf)
    assert jnp.allclose(y2, y2_ref, atol=1e-5, rtol=1e-5)

    print("KERNEL_OK")
</pallas_src>

<mosaic_0001>
module attributes {stable_mosaic.version = 11 : i64} {
  func.func @_conv1d_kernel(%arg0: i32, %arg1: i32, %arg2: i32, %arg3: memref<16x32xf32, #tpu.memory_space<vmem>>, %arg4: memref<32x64xf32, #tpu.memory_space<vmem>>, %arg5: memref<1x64xf32, #tpu.memory_space<vmem>>, %arg6: memref<16x64xf32, #tpu.memory_space<vmem>>, %arg7: memref<16x64xf32, #tpu.memory_space<vmem>>) attributes {dimension_semantics = [#tpu.dimension_semantics<parallel>, #tpu.dimension_semantics<parallel>, #tpu.dimension_semantics<arbitrary>], iteration_bounds = array<i64: 1, 1, 1>, scalar_prefetch = 0 : i64, scratch_operands = 1 : i64, tpu.core_type = #tpu.core_type<tc>, window_params = [{transform_indices = @transform_0, window_bounds = array<i64: 16, 32>}, {transform_indices = @transform_1, window_bounds = array<i64: 32, 64>}, {transform_indices = @transform_2, window_bounds = array<i64: 1, 64>}, {transform_indices = @transform_3, window_bounds = array<i64: 16, 64>}]} {
    %c0_i32 = arith.constant 0 : i32
    %0 = arith.cmpi eq, %arg2, %c0_i32 : i32
    %1 = arith.extui %0 : i1 to i32
    %c0_i32_0 = arith.constant 0 : i32
    %2 = arith.cmpi ne, %1, %c0_i32_0 : i32
    scf.if %2 {
      %cst_10 = arith.constant 0.000000e+00 : f32
      %12 = vector.broadcast %cst_10 : f32 to vector<16x64xf32>
      %c0_11 = arith.constant 0 : index
      %c0_12 = arith.constant 0 : index
      %13 = vector.load %arg7[%c0_11, %c0_12] : memref<16x64xf32, #tpu.memory_space<vmem>>, vector<16x64xf32>
      tpu.vector_store %arg7[%c0_11, %c0_12], %12 {strides = array<i32>} : memref<16x64xf32, #tpu.memory_space<vmem>>, vector<16x64xf32>,
    } else {
    }
    %c0 = arith.constant 0 : index
    %c0_1 = arith.constant 0 : index
    %3 = vector.load %arg7[%c0, %c0_1] : memref<16x64xf32, #tpu.memory_space<vmem>>, vector<16x64xf32>
    %c0_2 = arith.constant 0 : index
    %c0_3 = arith.constant 0 : index
    %4 = vector.load %arg3[%c0_2, %c0_3] : memref<16x32xf32, #tpu.memory_space<vmem>>, vector<16x32xf32>
    %c0_4 = arith.constant 0 : index
    %c0_5 = arith.constant 0 : index
    %5 = vector.load %arg4[%c0_4, %c0_5] : memref<32x64xf32, #tpu.memory_space<vmem>>, vector<32x64xf32>
    %cst = arith.constant dense<0.000000e+00> : vector<16x64xf32>
    %6 = tpu.matmul %4, %5, %cst {dimension_numbers = #tpu.dot_dimension_numbers<[1], [0], [0], [1], [0, 0, 1, 1], [], []>} : vector<16x32xf32>, vector<32x64xf32>, vector<16x64xf32> -> vector<16x64xf32>
    %7 = arith.addf %3, %6 : vector<16x64xf32>
    %c0_6 = arith.constant 0 : index
    %c0_7 = arith.constant 0 : index
    %8 = vector.load %arg7[%c0_6, %c0_7] : memref<16x64xf32, #tpu.memory_space<vmem>>, vector<16x64xf32>
    tpu.vector_store %arg7[%c0_6, %c0_7], %7 {strides = array<i32>} : memref<16x64xf32, #tpu.memory_space<vmem>>, vector<16x64xf32>,
    %c0_i32_8 = arith.constant 0 : i32
    %9 = arith.cmpi eq, %arg2, %c0_i32_8 : i32
    %10 = arith.extui %9 : i1 to i32
    %c0_i32_9 = arith.constant 0 : i32
    %11 = arith.cmpi ne, %10, %c0_i32_9 : i32
    scf.if %11 {
      %c0_10 = arith.constant 0 : index
      %c0_11 = arith.constant 0 : index
      %12 = vector.load %arg7[%c0_10, %c0_11] : memref<16x64xf32, #tpu.memory_space<vmem>>, vector<16x64xf32>
      %c0_12 = arith.constant 0 : index
      %c0_13 = arith.constant 0 : index
      %13 = vector.load %arg5[%c0_12, %c0_13] : memref<1x64xf32, #tpu.memory_space<vmem>>, vector<1x64xf32>
      %14 = vector.broadcast %13 : vector<1x64xf32> to vector<16x64xf32>
      %15 = arith.addf %12, %14 : vector<16x64xf32>
      %c0_14 = arith.constant 0 : index
      %c0_15 = arith.constant 0 : index
      %16 = vector.load %arg6[%c0_14, %c0_15] : memref<16x64xf32, #tpu.memory_space<vmem>>, vector<16x64xf32>
      tpu.vector_store %arg6[%c0_14, %c0_15], %15 {strides = array<i32>} : memref<16x64xf32, #tpu.memory_space<vmem>>, vector<16x64xf32>,
    } else {
    }
    return
  }
  func.func @transform_0(%arg0: i32, %arg1: i32, %arg2: i32) -> (i32, i32) {
    %c0_i32 = arith.constant 0 : i32
    return %arg0, %arg2 : i32, i32
  }
  func.func @transform_1(%arg0: i32, %arg1: i32, %arg2: i32) -> (i32, i32) {
    %c0_i32 = arith.constant 0 : i32
    return %arg2, %arg1 : i32, i32
  }
  func.func @transform_2(%arg0: i32, %arg1: i32, %arg2: i32) -> (i32, i32) {
    %c0_i32 = arith.constant 0 : i32
    %c0_i32_0 = arith.constant 0 : i32
    return %c0_i32, %arg1 : i32, i32
  }
  func.func @transform_3(%arg0: i32, %arg1: i32, %arg2: i32) -> (i32, i32) {
    %c0_i32 = arith.constant 0 : i32
    return %arg0, %arg1 : i32, i32
  }
}

</mosaic_0001>

<llo_original>
// kernel: conv1d_forward.1
$region0: #{conv1d_forward.1}
  #allocation0 [shape = 'u32[]', space=smem, size = 0x4, offset = 0x4, fixed_abs, tag = 'smem constant byte address 0x4 - core index']
  #allocation1 [shape = 'u32[144,128]{1,0:T(1,128)}', space=vmem, size = 0x12000, scoped, tag = 'internal scratch']
  #allocation2 [shape = 'f32[16,64]{1,0:T(8,128)}', space=vmem, size = 0x2000, scoped, tag = 'scratch operand']
  %s0 = inlined_call_operand.hbm [shape: f32[16,32], index: 0, kind: input, shape index: {}]
  %s1 = inlined_call_operand.hbm [shape: f32[32,64], index: 1, kind: input, shape index: {}]
  %s2 = inlined_call_operand.vmem [shape: f32[1,64], index: 2, kind: input, shape index: {}]
  %s3 = inlined_call_operand.hbm [shape: f32[16,64], index: 3, kind: output, shape index: {}]
  %s4 = sld [smem:[#allocation0]]
  $region38: #{conv1d_forward.1} parent=0
    _
  %s6 = ssub.s32 1, %s4
  %s7 = scalar_select 0, %s6, %s4
  $region1: #{conv1d_forward.1} parent=0
    #allocation3 [shape = 'u8[8192]{0}', space=vmem, size = 0x2000, scoped, tag = 'input window, operand 0, single buffered']
    #allocation4 [shape = 's32[1]{0}', space=sflag, size = 0x4, scoped, tag = 'scoped memory for conv1d_forward.1']
    #allocation5 [shape = 's32[1]{0}', space=sflag, size = 0x4, scoped, tag = 'scoped memory for conv1d_forward.1']
    #allocation6 [shape = 'u8[16384]{0}', space=vmem, size = 0x4000, scoped, tag = 'input window, operand 1, single buffered']
    #allocation7 [shape = 's32[1]{0}', space=sflag, size = 0x4, scoped, tag = 'scoped memory for conv1d_forward.1']
    #allocation8 [shape = 'u8[8192]{0}', space=vmem, size = 0x2000, scoped, tag = 'output window, operand 0, single buffered']
    %8 = vsyncpa [#allocation4], 0
    %9 = vsyncpa [#allocation7], 0
    %10 = vsyncpa [#allocation5], 0
    // Predicated region
    $region2: #{conv1d_forward.1} parent=1 // pred_check
      _
    $region3: #{conv1d_forward.1} parent=1 // pred_check_branch
      %12 = sbr.rel (0) target = $region5
    $region4: #{conv1d_forward.1} parent=1 // pred_region
      %s14 = ssub.s32 256, 256
      %15 = vsyncadd [#allocation4], %s14
      %s16 = sshll.u32 [#allocation3], 4
      %s17 = int_to_ptr.vmem [resolvable:$true] %s16
      %22 = dma.hbm_to_vmem [thread:$0]  %s0, 256, %s17, [#allocation4], 128, 128, 8
    $region5: #{conv1d_forward.1} parent=1 // pred_fallthru
      _
    // Predicated region
    $region6: #{conv1d_forward.1} parent=1 // pred_check
      _
    $region7: #{conv1d_forward.1} parent=1 // pred_check_branch
      %24 = sbr.rel (0) target = $region9
    $region8: #{conv1d_forward.1} parent=1 // pred_region
      %s26 = ssub.s32 512, 512
      %27 = vsyncadd [#allocation7], %s26
      %s28 = sshll.u32 [#allocation6], 4
      %s29 = int_to_ptr.vmem [resolvable:$true] %s28
      %34 = dma.hbm_to_vmem [thread:$0]  %s1, 512, %s29, [#allocation7], 128, 128, 8
    $region9: #{conv1d_forward.1} parent=1 // pred_fallthru
      _
    // Predicated region
    $region10: #{conv1d_forward.1} parent=1 // pred_check
      _
    $region11: #{conv1d_forward.1} parent=1 // pred_check_branch
      %36 = sbr.rel (0) target = $region13
    $region12: #{conv1d_forward.1} parent=1 // pred_region
      _
    $region13: #{conv1d_forward.1} parent=1 // pred_fallthru
      _
    // Predicated region
    $region14: #{conv1d_forward.1} parent=1 // pred_check
      _
    $region15: #{conv1d_forward.1} parent=1 // pred_check_branch
      %38 = sbr.rel (0) target = $region17
    $region16: #{conv1d_forward.1} parent=1 // pred_region
      %39 = dma.done [#allocation4], 256
    $region17: #{conv1d_forward.1} parent=1 // pred_fallthru
      _
    // Predicated region
    $region18: #{conv1d_forward.1} parent=1 // pred_check
      _
    $region19: #{conv1d_forward.1} parent=1 // pred_check_branch
      %41 = sbr.rel (0) target = $region21
    $region20: #{conv1d_forward.1} parent=1 // pred_region
      %42 = dma.done [#allocation7], 512
    $region21: #{conv1d_forward.1} parent=1 // pred_fallthru
      _
    %p43 = scmp.eq.s32.totalorder 0, 0
    // Predicated region
    $region22: #{conv1d_forward.1} parent=1 // pred_check
      %p44 = pneg %p43
    $region23: #{conv1d_forward.1} parent=1 // pred_check_branch
      %46 = sbr.rel (%p44) target = $region25
    $region24: #{conv1d_forward.1} parent=1 // pred_region
      %vm47 = vcmask 523264
      %48 = vst.msk [vmem:[#allocation2] sm:$0xff] %vm47, 0.0
      %49 = vst.msk [vmem:[#allocation2 + $0x8] sm:$0xff] %vm47, 0.0
    $region25: #{conv1d_forward.1} parent=1 // pred_fallthru
      _
    %v50 = vld [vmem:[#allocation2] sm:$0xff]
    %v51 = vld [vmem:[#allocation2 + $0x8] sm:$0xff]
    %v52 = vld [vmem:[#allocation3] sm:$0xff]
    %v53 = vld [vmem:[#allocation3 + $0x8] sm:$0xff]
    %v54 = vld [vmem:[#allocation6] sm:$0xff]
    %v55 = vld [vmem:[#allocation6 + $0x8] sm:$0xff]
    %v56 = vld [vmem:[#allocation6 + $0x10] sm:$0xff]
    %v57 = vld [vmem:[#allocation6 + $0x18] sm:$0xff]
    %vm58 = vcmask 261120
    %v60 = vsel %vm58, %v52, 0
    %v63 = vsel %vm58, %v53, 0
    %65 = vmatprep.subr.mxu0 0.0
    %66 = vmatpush1.msra.mxu0 0.0
    %67 = vmatprep.subr.mxu0 0.0
    %68 = vmatpush1.msra.mxu0 0.0
    %69 = vmatprep.subr.mxu0 0.0
    %70 = vmatpush1.msra.mxu0 0.0
    %71 = vmatprep.subr.mxu0 0.0
    %72 = vmatpush1.msra.mxu0 0.0
    %73 = vmatprep.subr.mxu0 0.0
    %74 = vmatpush1.msra.mxu0 0.0
    %75 = vmatprep.subr.mxu0 0.0
    %76 = vmatpush1.msra.mxu0 0.0
    %77 = vmatprep.subr.mxu0 0.0
    %78 = vmatpush1.msra.mxu0 0.0
    %79 = vmatprep.subr.mxu0 0.0
    %80 = vmatpush1.msra.mxu0 0.0
    %81 = vmatprep.subr.mxu0 0.0
    %82 = vmatpush1.msra.mxu0 0.0
    %83 = vmatprep.subr.mxu0 0.0
    %84 = vmatpush1.msra.mxu0 0.0
    %85 = vmatprep.subr.mxu0 0.0
    %86 = vmatpush1.msra.mxu0 0.0
    %87 = vmatprep.subr.mxu0 0.0
    %88 = vmatpush1.msra.mxu0 0.0
    %89 = vmatprep.subr.mxu0 0.0
    %90 = vmatpush1.msra.mxu0 %v57
    %91 = vmatprep.subr.mxu0 0.0
    %92 = vmatpush1.msra.mxu0 %v56
    %93 = vmatprep.subr.mxu0 0.0
    %94 = vmatpush1.msra.mxu0 %v55
    %95 = vmatprep.subr.mxu0 0.0
    %96 = vmatpush1.msra.mxu0 %v54
    %97 = vmatprep.subr.mxu0 0.0
    %98 = vmatpush2.msra.mxu0 0.0
    %99 = vmatprep.subr.mxu0 0.0
    %100 = vmatpush2.msra.mxu0 0.0
    %101 = vmatprep.subr.mxu0 0.0
    %102 = vmatpush2.msra.mxu0 0.0
    %103 = vmatprep.subr.mxu0 0.0
    %104 = vmatpush2.msra.mxu0 0.0
    %105 = vmatprep.subr.mxu0 0.0
    %106 = vmatpush2.msra.mxu0 0.0
    %107 = vmatprep.subr.mxu0 0.0
    %108 = vmatpush2.msra.mxu0 0.0
    %109 = vmatprep.subr.mxu0 0.0
    %110 = vmatpush2.msra.mxu0 0.0
    %111 = vmatprep.subr.mxu0 0.0
    %112 = vmatpush2.msra.mxu0 0.0
    %113 = vmatprep.subr.mxu0 0.0
    %114 = vmatpush2.msra.mxu0 0.0
    %115 = vmatprep.subr.mxu0 0.0
    %116 = vmatpush2.msra.mxu0 0.0
    %117 = vmatprep.subr.mxu0 0.0
    %118 = vmatpush2.msra.mxu0 0.0
    %119 = vmatprep.subr.mxu0 0.0
    %120 = vmatpush2.msra.mxu0 0.0
    %121 = vmatprep.subr.mxu0 0.0
    %122 = vmatpush2.msra.mxu0 0.0
    %123 = vmatprep.subr.mxu0 0.0
    %124 = vmatpush2.msra.mxu0 0.0
    %125 = vmatprep.subr.mxu0 0.0
    %126 = vmatpush2.msra.mxu0 0.0
    %127 = vmatprep.subr.mxu0 0.0
    %128 = vmatpush2.msra.mxu0 0.0
    %129 = vmatprep.mubr.f32.mxu0 0.0
    %130 = vmatmul.mubr.f32.gmra.mxu0 %v60
    %v131 = vpop.f32.mrf.mxu0
    %v132 = vadd.f32 0.0, %v131
    %v133 = vpop.f32.mrf.mxu0
    %134 = vmatprep.mubr.f32.mxu0 0.0
    %135 = vmatmul.mubr.f32.gmra.mxu0 %v63
    %v136 = vpop.f32.mrf.mxu0
    %v137 = vadd.f32 0.0, %v136
    %v138 = vpop.f32.mrf.mxu0
    %139 = vdwg.mxu0
    %v140 = vadd.f32 %v50, %v132
    %v141 = vadd.f32 %v51, %v137
    %vm142 = vcmask 523264
    %143 = vst.msk [vmem:[#allocation2] sm:$0xff] %vm142, %v140
    %144 = vst.msk [vmem:[#allocation2 + $0x8] sm:$0xff] %vm142, %v141
    // Predicated region
    $region26: #{conv1d_forward.1} parent=1 // pred_check
      %p145 = pneg %p43
    $region27: #{conv1d_forward.1} parent=1 // pred_check_branch
      %147 = sbr.rel (%p145) target = $region29
    $region28: #{conv1d_forward.1} parent=1 // pred_region
      %v148 = vld [vmem:[#allocation2] sm:$0xff]
      %v149 = vld [vmem:[#allocation2 + $0x8] sm:$0xff]
      %v150 = vld [vmem:[%s2] sm:$0x1]
      %v152 = vlaneseq
      %v153 = vshrl.u32 %v152, 7
      %v154 = vsub.s32 0, %v153
      %v155 = vrot.slane %v150, %v154
      %v157 = vadd.f32 %v148, %v155
      %v158 = vadd.f32 %v149, %v155
      %159 = vst.msk [vmem:[#allocation8] sm:$0xff] %vm142, %v157
      %160 = vst.msk [vmem:[#allocation8 + $0x8] sm:$0xff] %vm142, %v158
    $region29: #{conv1d_forward.1} parent=1 // pred_fallthru
      _
    // Predicated region
    $region30: #{conv1d_forward.1} parent=1 // pred_check
      _
    $region31: #{conv1d_forward.1} parent=1 // pred_check_branch
      %162 = sbr.rel (0) target = $region33
    $region32: #{conv1d_forward.1} parent=1 // pred_region
      %s164 = ssub.s32 256, 256
      %165 = vsyncadd [#allocation5], %s164
      %s166 = sshll.u32 [#allocation8], 4
      %s167 = int_to_ptr.vmem [resolvable:$true] %s166
      %172 = dma.vmem_to_hbm [thread:$0]  %s167, 256, %s3, [#allocation5], 128, 128, 8
    $region33: #{conv1d_forward.1} parent=1 // pred_fallthru
      _
    // Predicated region
    $region34: #{conv1d_forward.1} parent=1 // pred_check
      _
    $region35: #{conv1d_forward.1} parent=1 // pred_check_branch
      %174 = sbr.rel (0) target = $region37
    $region36: #{conv1d_forward.1} parent=1 // pred_region
      %175 = dma.done [#allocation5], 256
    $region37: #{conv1d_forward.1} parent=1 // pred_fallthru
      _
    %176 = vsyncpa [#allocation4], 1
    %177 = vsyncpa [#allocation7], 1
    %178 = vsyncpa [#allocation5], 1

</llo_original>
